<compile_context>
chip_gen: v5e
topology: v5e:2x2
jax: 0.10.0
libtpu: 0.0.40
codegen_flags: <defaults>
</compile_context>

<pallas_src>
import jax
import jax.numpy as jnp
from jax.experimental import pallas as pl
from jax.experimental.pallas import tpu as pltpu


def _add_kernel(c_ref, x_ref, o_ref):
    # Lane-dense path (H < 64): pure VPU add in the native (nb, H, W) layout.
    o_ref[...] = c_ref[...] + x_ref[...]


def _add_transpose_kernel(c_ref, x_ref, o_ref):
    # Wide-H path: transpose(c)+transpose(x) == transpose(c+x)
    # -> one XLU transpose per tile, applied to the sum.
    o_ref[...] = jnp.swapaxes(c_ref[...] + x_ref[...], -2, -1)


def _cdiv(a: int, b: int) -> int:
    return -(-a // b)


def _choose_leading_block(n: int, bytes_per_n: int,
                          target_block_bytes: int = 6 * 1024 * 1024,
                          min_grid: int = 4):
    """Pick the leading-axis block size (nb) and grid length.

    Keeps each block set around `target_block_bytes` while ensuring the grid
    has at least min(n, min_grid) steps so double-buffering overlaps DMA with
    compute and the single 'parallel' axis splits across 2 TCs on v7x.
    Partial trailing block on the leading axis is fine for an elementwise op.
    """
    nb = max(1, min(n, target_block_bytes // max(bytes_per_n, 1)))
    desired_grid = min(n, min_grid)
    if desired_grid > 0:
        nb = min(nb, _cdiv(n, desired_grid))
    nb = max(1, nb)
    return nb, _cdiv(n, nb)


def const_eval_transpose_add(constant: jax.Array, x: jax.Array,
                             dim0: int = 2, dim1: int = 3) -> jax.Array:
    """out = transpose(constant, dim0, dim1) + transpose(x, dim0, dim1).

    Specialized for 4-D inputs with (dim0, dim1) = (2, 3) (swap last two dims),
    matching the module's kwargs.
    """
    assert constant.shape == x.shape and constant.dtype == x.dtype
    assert x.ndim == 4 and {dim0, dim1} == {2, 3}
    B, C, H, W = x.shape
    N = B * C

    # Both operands stay in their original layout -> both input DMAs lane-dense on W.
    c3 = constant.reshape(N, H, W)
    x3 = x.reshape(N, H, W)

    itemsize = jnp.dtype(x.dtype).itemsize
    bytes_per_n = 3 * H * W * itemsize              # c + x + out per leading element
    nb, num_blocks = _choose_leading_block(N, bytes_per_n)
    grid = (num_blocks,)

    # Narrow-lane-store decision: output lane dim after an in-kernel transpose is H.
    transpose_in_kernel = H >= 64
    if transpose_in_kernel:
        kernel = _add_transpose_kernel
        out_shape3 = (N, W, H)
        out_block = (nb, W, H)
    else:
        kernel = _add_kernel
        out_shape3 = (N, H, W)
        out_block = (nb, H, W)

    # NOTE: last two block dims equal the full array dims, so the (8,128)
    # divisibility rule is satisfied for any H, W; only the leading block dim
    # may be partial.
    out3 = pl.pallas_call(
        kernel,
        out_shape=jax.ShapeDtypeStruct(out_shape3, x.dtype),
        grid_spec=pl.GridSpec(
            grid=grid,
            in_specs=[
                pl.BlockSpec((nb, H, W), lambda i: (i, 0, 0)),   # constant (original layout)
                pl.BlockSpec((nb, H, W), lambda i: (i, 0, 0)),   # activation
            ],
            out_specs=pl.BlockSpec(out_block, lambda i: (i, 0, 0)),
        ),
        compiler_params=pltpu.CompilerParams(
            dimension_semantics=("parallel",),
            vmem_limit_bytes=32 * 1024 * 1024,       # headroom; safe on v5e/v6e/v7x
        ),
        cost_estimate=pl.CostEstimate(
            flops=N * H * W,                         # one add per output element
            transcendentals=0,
            bytes_accessed=3 * N * H * W * itemsize,
        ),
    )(c3, x3)

    if transpose_in_kernel:
        return out3.reshape(B, C, W, H)
    # Lane-dense add in the kernel; one XLA transpose pass outside produces the
    # (B, C, W, H) result without masked narrow-lane stores in the kernel.
    return jnp.swapaxes(out3.reshape(B, C, H, W), -2, -1)


if __name__ == "__main__":
    key = jax.random.PRNGKey(0)
    kx, kc, kx2, kc2 = jax.random.split(key, 4)
    dtype = jnp.float32

    # Small shapes consistent with the test module (4-D tensor, transpose dims 2 & 3).
    # Exercises the lane-dense-add (H < 64) path.
    B, C, H, W = 2, 4, 16, 16
    x = jax.random.uniform(kx, (B, C, H, W), dtype=dtype, minval=-1.0, maxval=1.0)
    # Deterministic "constant" buffer (stand-in for TensorUtils.create_torch_constant
    # with value_range (-1, 1)).
    constant = jax.random.uniform(kc, (B, C, H, W), dtype=dtype, minval=-1.0, maxval=1.0)

    out = jax.block_until_ready(const_eval_transpose_add(constant, x))
    ref = jnp.swapaxes(constant, -2, -1) + jnp.swapaxes(x, -2, -1)
    assert out.shape == (B, C, W, H)
    assert jnp.allclose(out, ref, atol=1e-6, rtol=1e-6)

    # Second small check exercising the in-kernel-transpose (H >= 64) path.
    B2, C2, H2, W2 = 1, 2, 128, 128
    x2 = jax.random.uniform(kx2, (B2, C2, H2, W2), dtype=dtype, minval=-1.0, maxval=1.0)
    c2 = jax.random.uniform(kc2, (B2, C2, H2, W2), dtype=dtype, minval=-1.0, maxval=1.0)
    out2 = jax.block_until_ready(const_eval_transpose_add(c2, x2))
    ref2 = jnp.swapaxes(c2, -2, -1) + jnp.swapaxes(x2, -2, -1)
    assert out2.shape == (B2, C2, W2, H2)
    assert jnp.allclose(out2, ref2, atol=1e-6, rtol=1e-6)

    print("KERNEL_OK")
</pallas_src>

<mosaic_0001>
module attributes {stable_mosaic.version = 11 : i64} {
  func.func @_add_kernel(%arg0: i32, %arg1: memref<2x16x16xf32, #tpu.memory_space<vmem>>, %arg2: memref<2x16x16xf32, #tpu.memory_space<vmem>>, %arg3: memref<2x16x16xf32, #tpu.memory_space<vmem>>) attributes {dimension_semantics = [#tpu.dimension_semantics<parallel>], iteration_bounds = array<i64: 4>, scalar_prefetch = 0 : i64, scratch_operands = 0 : i64, tpu.core_type = #tpu.core_type<tc>, window_params = [{transform_indices = @transform_0, window_bounds = array<i64: 2, 16, 16>}, {transform_indices = @transform_1, window_bounds = array<i64: 2, 16, 16>}, {transform_indices = @transform_2, window_bounds = array<i64: 2, 16, 16>}]} {
    %c0 = arith.constant 0 : index
    %c0_0 = arith.constant 0 : index
    %c0_1 = arith.constant 0 : index
    %0 = vector.load %arg1[%c0, %c0_0, %c0_1] : memref<2x16x16xf32, #tpu.memory_space<vmem>>, vector<2x16x16xf32>
    %c0_2 = arith.constant 0 : index
    %c0_3 = arith.constant 0 : index
    %c0_4 = arith.constant 0 : index
    %1 = vector.load %arg2[%c0_2, %c0_3, %c0_4] : memref<2x16x16xf32, #tpu.memory_space<vmem>>, vector<2x16x16xf32>
    %2 = arith.addf %0, %1 : vector<2x16x16xf32>
    %c0_5 = arith.constant 0 : index
    %c0_6 = arith.constant 0 : index
    %c0_7 = arith.constant 0 : index
    %3 = vector.load %arg3[%c0_5, %c0_6, %c0_7] : memref<2x16x16xf32, #tpu.memory_space<vmem>>, vector<2x16x16xf32>
    tpu.vector_store %arg3[%c0_5, %c0_6, %c0_7], %2 {strides = array<i32>} : memref<2x16x16xf32, #tpu.memory_space<vmem>>, vector<2x16x16xf32>,
    return
  }
  func.func @transform_0(%arg0: i32) -> (i32, i32, i32) {
    %c0_i32 = arith.constant 0 : i32
    %c0_i32_0 = arith.constant 0 : i32
    %c0_i32_1 = arith.constant 0 : i32
    return %arg0, %c0_i32, %c0_i32_0 : i32, i32, i32
  }
  func.func @transform_1(%arg0: i32) -> (i32, i32, i32) {
    %c0_i32 = arith.constant 0 : i32
    %c0_i32_0 = arith.constant 0 : i32
    %c0_i32_1 = arith.constant 0 : i32
    return %arg0, %c0_i32, %c0_i32_0 : i32, i32, i32
  }
  func.func @transform_2(%arg0: i32) -> (i32, i32, i32) {
    %c0_i32 = arith.constant 0 : i32
    %c0_i32_0 = arith.constant 0 : i32
    %c0_i32_1 = arith.constant 0 : i32
    return %arg0, %c0_i32, %c0_i32_0 : i32, i32, i32
  }
}

</mosaic_0001>

<llo_original>
// kernel: tpu_custom_call.1
$region0: #{tpu_custom_call.1}
  #allocation0 [shape = 'u32[]', space=smem, size = 0x4, offset = 0x4, fixed_abs, tag = 'smem constant byte address 0x4 - core index']
  #allocation1 [shape = 'u32[72,128]{1,0:T(1,128)}', space=vmem, size = 0x9000, scoped, tag = 'internal scratch']
  %s0 = inlined_call_operand.hbm [shape: f32[8,16,16], index: 0, kind: input, shape index: {}]
  %s1 = inlined_call_operand.hbm [shape: f32[8,16,16], index: 1, kind: input, shape index: {}]
  %s2 = inlined_call_operand.hbm [shape: f32[8,16,16], index: 2, kind: output, shape index: {}]
  %s3 = sld [smem:[#allocation0]]
  $region49: #{tpu_custom_call.1} parent=0
    _
  %s5 = ssub.s32 1, %s3
  %s6 = scalar_select 0, %s5, %s3
  $region1: #{tpu_custom_call.1} parent=0
    #allocation2 [shape = 'u8[32768]{0}', space=vmem, size = 0x8000, scoped, tag = 'input window, operand 0']
    #allocation3 [shape = 's32[2]{0}', space=sflag, size = 0x8, scoped, tag = 'scoped memory for tpu_custom_call.1']
    #allocation4 [shape = 's32[2]{0}', space=sflag, size = 0x8, scoped, tag = 'scoped memory for tpu_custom_call.1']
    #allocation5 [shape = 'u8[32768]{0}', space=vmem, size = 0x8000, scoped, tag = 'input window, operand 1']
    #allocation6 [shape = 's32[2]{0}', space=sflag, size = 0x8, scoped, tag = 'scoped memory for tpu_custom_call.1']
    #allocation7 [shape = 'u8[32768]{0}', space=vmem, size = 0x8000, scoped, tag = 'output window, operand 0']
    %7 = vsyncpa [#allocation3], 0
    %s8 = scalar_lea.sflag [#allocation3], 1
    %9 = vsyncpa %s8, 0
    %10 = vsyncpa [#allocation6], 0
    %s11 = scalar_lea.sflag [#allocation6], 1
    %12 = vsyncpa %s11, 0
    %13 = vsyncpa [#allocation4], 0
    %s14 = scalar_lea.sflag [#allocation4], 1
    %15 = vsyncpa %s14, 0
    loop: start=0, step=1, limit=6
    $region2: #{tpu_custom_call.1} parent=1 // loop_pre_header
      _
    $region3: #{tpu_custom_call.1} parent=1 // loop_header
      %s17 = sphi 0, %s21
      %p18 = scmp.ge.s32.totalorder %s17, 6
      %s27 = sphi 0, %s29
      %s30 = sphi 0, %s27
      %s31 = sphi 0, %s30
      %s47 = sphi 0, %s31
      %s53 = sphi 0, %s55
      %s56 = sphi 0, %s53
      %s57 = sphi 0, %s56
      %s73 = sphi 0, %s57
      %s79 = sphi 0, %s81
      %s82 = sphi 0, %s79
      %s83 = sphi 0, %s82
      %s99 = sphi 0, %s83
    $region4: #{tpu_custom_call.1} parent=1 // loop_header_branch
      %20 = sbr.rel (%p18) target = $region8
    $region5: #{tpu_custom_call.1} parent=1 // loop_body
      %s22 = ssub.s32 %s17, 1
      %s23 = ssub.s32 %s17, 2
      %s24 = sadd.s32 %s17, 1
      %s25 = ssub.s32 %s17, %s24
      %p26 = scmp.eq.s32.totalorder %s25, 0
      %s28 = sadd.s32 %s27, 1
      %s29 = scalar_select %p26, %s27, %s28
      %p32 = pneg %p26
      %p33 = scmp.eq.s32.totalorder %s17, 3
      %p34 = por %p32, %p33
      %p35 = scmp.ne.s32.totalorder %s27, %s30
      %p36 = scmp.eq.s32.totalorder %s17, 0
      %p37 = por %p35, %p36
      %p38 = scmp.ne.s32.totalorder %s27, %s30
      %p39 = scmp.eq.s32.totalorder %s22, 3
      %p40 = por %p38, %p39
      %p41 = scmp.ne.s32.totalorder %s30, %s31
      %p42 = scmp.eq.s32.totalorder %s22, 0
      %p43 = por %p41, %p42
      %p44 = scmp.ne.s32.totalorder %s30, %s31
      %p45 = scmp.eq.s32.totalorder %s23, 3
      %p46 = por %p44, %p45
      %p48 = scmp.ne.s32.totalorder %s31, %s47
      %p49 = scmp.eq.s32.totalorder %s23, 0
      %p50 = por %p48, %p49
      %s51 = ssub.s32 %s17, %s24
      %p52 = scmp.eq.s32.totalorder %s51, 0
      %s54 = sadd.s32 %s53, 1
      %s55 = scalar_select %p52, %s53, %s54
      %p58 = pneg %p52
      %p59 = scmp.eq.s32.totalorder %s17, 3
      %p60 = por %p58, %p59
      %p61 = scmp.ne.s32.totalorder %s53, %s56
      %p62 = scmp.eq.s32.totalorder %s17, 0
      %p63 = por %p61, %p62
      %p64 = scmp.ne.s32.totalorder %s53, %s56
      %p65 = scmp.eq.s32.totalorder %s22, 3
      %p66 = por %p64, %p65
      %p67 = scmp.ne.s32.totalorder %s56, %s57
      %p68 = scmp.eq.s32.totalorder %s22, 0
      %p69 = por %p67, %p68
      %p70 = scmp.ne.s32.totalorder %s56, %s57
      %p71 = scmp.eq.s32.totalorder %s23, 3
      %p72 = por %p70, %p71
      %p74 = scmp.ne.s32.totalorder %s57, %s73
      %p75 = scmp.eq.s32.totalorder %s23, 0
      %p76 = por %p74, %p75
      %s77 = ssub.s32 %s17, %s24
      %p78 = scmp.eq.s32.totalorder %s77, 0
      %s80 = sadd.s32 %s79, 1
      %s81 = scalar_select %p78, %s79, %s80
      %p84 = pneg %p78
      %p85 = scmp.eq.s32.totalorder %s17, 3
      %p86 = por %p84, %p85
      %p87 = scmp.ne.s32.totalorder %s79, %s82
      %p88 = scmp.eq.s32.totalorder %s17, 0
      %p89 = por %p87, %p88
      %p90 = scmp.ne.s32.totalorder %s79, %s82
      %p91 = scmp.eq.s32.totalorder %s22, 3
      %p92 = por %p90, %p91
      %p93 = scmp.ne.s32.totalorder %s82, %s83
      %p94 = scmp.eq.s32.totalorder %s22, 0
      %p95 = por %p93, %p94
      %p96 = scmp.ne.s32.totalorder %s82, %s83
      %p97 = scmp.eq.s32.totalorder %s23, 3
      %p98 = por %p96, %p97
      %p100 = scmp.ne.s32.totalorder %s83, %s99
      %p101 = scmp.eq.s32.totalorder %s23, 0
      %p102 = por %p100, %p101
      %p103 = scmp.le.s32.totalorder 1, %s17
      %p104 = scmp.lt.s32.totalorder %s17, 5
      %p105 = pnand %p103, %p104
      %p106 = pneg %p105
      // Predicated region
      $region9: #{tpu_custom_call.1} parent=5 // pred_check
        _
      $region10: #{tpu_custom_call.1} parent=5 // pred_check_branch
        %108 = sbr.rel (%p105) target = $region12
      $region11: #{tpu_custom_call.1} parent=5 // pred_region
        %s109 = ssub.s32 %s17, 1
      $region12: #{tpu_custom_call.1} parent=5 // pred_fallthru
        _
      %p110 = scmp.lt.s32.totalorder %s17, 4
      // Predicated region
      $region13: #{tpu_custom_call.1} parent=5 // pred_check
        %p111 = pneg %p110
      $region14: #{tpu_custom_call.1} parent=5 // pred_check_branch
        %113 = sbr.rel (%p111) target = $region16
      $region15: #{tpu_custom_call.1} parent=5 // pred_region
        // Predicated region
        $region17: #{tpu_custom_call.1} parent=15 // pred_check
          %p114 = pneg %p37
        $region18: #{tpu_custom_call.1} parent=15 // pred_check_branch
          %116 = sbr.rel (%p114) target = $region20
        $region19: #{tpu_custom_call.1} parent=15 // pred_region
          %s117 = sand.u32 %s27, 1
          %s118 = scalar_lea.sflag [#allocation3], %s117
          %s119 = sand.u32 %s27, 1
          %s120 = smul.addr %s119, 32
          %s121 = scalar_lea.vmem [#allocation2], %s120
          %s122 = smul.u32 2, %s17
          %124 = vsyncadd %s118, 0
          %s125 = smul.addr %s122, 2
          %s126 = smul.addr %s125, 8
          %s127 = scalar_lea.hbm %s0, %s126
          %s128 = sshll.u32 %s127, 4
          %s129 = int_to_ptr.hbm [resolvable:$true] %s128
          %s130 = sshll.u32 %s121, 4
          %s131 = int_to_ptr.vmem [resolvable:$true] %s130
          %136 = dma.hbm_to_vmem [thread:$0]  %s129, 512, %s131, %s118, 128, 128, 8
        $region20: #{tpu_custom_call.1} parent=15 // pred_fallthru
          _
        // Predicated region
        $region21: #{tpu_custom_call.1} parent=15 // pred_check
          %p137 = pneg %p63
        $region22: #{tpu_custom_call.1} parent=15 // pred_check_branch
          %139 = sbr.rel (%p137) target = $region24
        $region23: #{tpu_custom_call.1} parent=15 // pred_region
          %s140 = sand.u32 %s53, 1
          %s141 = scalar_lea.sflag [#allocation6], %s140
          %s142 = sand.u32 %s53, 1
          %s143 = smul.addr %s142, 32
          %s144 = scalar_lea.vmem [#allocation5], %s143
          %s145 = smul.u32 2, %s17
          %147 = vsyncadd %s141, 0
          %s148 = smul.addr %s145, 2
          %s149 = smul.addr %s148, 8
          %s150 = scalar_lea.hbm %s1, %s149
          %s151 = sshll.u32 %s150, 4
          %s152 = int_to_ptr.hbm [resolvable:$true] %s151
          %s153 = sshll.u32 %s144, 4
          %s154 = int_to_ptr.vmem [resolvable:$true] %s153
          %159 = dma.hbm_to_vmem [thread:$0]  %s152, 512, %s154, %s141, 128, 128, 8
        $region24: #{tpu_custom_call.1} parent=15 // pred_fallthru
          _
      $region16: #{tpu_custom_call.1} parent=5 // pred_fallthru
        _
      %p160 = scmp.le.s32.totalorder 1, %s17
      %p161 = scmp.lt.s32.totalorder %s17, 5
      %p162 = pnand %p160, %p161
      %p163 = pneg %p162
      // Predicated region
      $region25: #{tpu_custom_call.1} parent=5 // pred_check
        _
      $region26: #{tpu_custom_call.1} parent=5 // pred_check_branch
        %165 = sbr.rel (%p162) target = $region28
      $region27: #{tpu_custom_call.1} parent=5 // pred_region
        %s166 = ssub.s32 %s17, 1
        %s167 = sand.u32 %s30, 1
        %s168 = scalar_lea.sflag [#allocation3], %s167
        %s169 = sand.u32 %s30, 1
        %s170 = smul.addr %s169, 32
        %s171 = scalar_lea.vmem [#allocation2], %s170
        // Predicated region
        $region29: #{tpu_custom_call.1} parent=27 // pred_check
          %p172 = pneg %p43
        $region30: #{tpu_custom_call.1} parent=27 // pred_check_branch
          %174 = sbr.rel (%p172) target = $region32
        $region31: #{tpu_custom_call.1} parent=27 // pred_region
          %176 = dma.done %s168, 512
        $region32: #{tpu_custom_call.1} parent=27 // pred_fallthru
          _
        %s177 = sand.u32 %s56, 1
        %s178 = scalar_lea.sflag [#allocation6], %s177
        %s179 = sand.u32 %s56, 1
        %s180 = smul.addr %s179, 32
        %s181 = scalar_lea.vmem [#allocation5], %s180
        // Predicated region
        $region33: #{tpu_custom_call.1} parent=27 // pred_check
          %p182 = pneg %p69
        $region34: #{tpu_custom_call.1} parent=27 // pred_check_branch
          %184 = sbr.rel (%p182) target = $region36
        $region35: #{tpu_custom_call.1} parent=27 // pred_region
          %186 = dma.done %s178, 512
        $region36: #{tpu_custom_call.1} parent=27 // pred_fallthru
          _
        %s187 = sand.u32 %s30, 1
        %s188 = scalar_lea.sflag [#allocation3], %s187
        %s189 = sand.u32 %s30, 1
        %s190 = smul.addr %s189, 32
        %s191 = scalar_lea.vmem [#allocation2], %s190
        %p192 = pneg %p43
        %p193 = pneg %p40
        %s194 = sand.u32 %s56, 1
        %s195 = scalar_lea.sflag [#allocation6], %s194
        %s196 = sand.u32 %s56, 1
        %s197 = smul.addr %s196, 32
        %s198 = scalar_lea.vmem [#allocation5], %s197
        %p199 = pneg %p69
        %p200 = pneg %p66
        %p201 = pneg %p95
        %p202 = pneg %p92
        %s203 = sand.u32 %s82, 1
        %s204 = scalar_lea.sflag [#allocation4], %s203
        %s205 = sand.u32 %s82, 1
        %s206 = smul.addr %s205, 32
        %s207 = scalar_lea.vmem [#allocation7], %s206
        %s208 = smul.u32 2, %s22
        %s209 = smul.u32 2, %s22
        %s210 = smul.u32 2, %s22
        %v211 = vld [vmem:[%s171] sm:$0xff]
        %v212 = vld [vmem:[%s171 + $0x8] sm:$0xff]
        %v213 = vld [vmem:[%s171 + $0x10] sm:$0xff]
        %v214 = vld [vmem:[%s171 + $0x18] sm:$0xff]
        %v215 = vld [vmem:[%s181] sm:$0xff]
        %v216 = vld [vmem:[%s181 + $0x8] sm:$0xff]
        %v217 = vld [vmem:[%s181 + $0x10] sm:$0xff]
        %v218 = vld [vmem:[%s181 + $0x18] sm:$0xff]
        %v219 = vadd.f32 %v211, %v215
        %v220 = vadd.f32 %v212, %v216
        %v221 = vadd.f32 %v213, %v217
        %v222 = vadd.f32 %v214, %v218
        %vm223 = vcmask 130048
        %224 = vst.msk [vmem:[%s207] sm:$0xff] %vm223, %v219
        %225 = vst.msk [vmem:[%s207 + $0x8] sm:$0xff] %vm223, %v220
        %226 = vst.msk [vmem:[%s207 + $0x10] sm:$0xff] %vm223, %v221
        %227 = vst.msk [vmem:[%s207 + $0x18] sm:$0xff] %vm223, %v222
        %s228 = sand.u32 %s82, 1
        %s229 = scalar_lea.sflag [#allocation4], %s228
        %s230 = sand.u32 %s82, 1
        %s231 = smul.addr %s230, 32
        %s232 = scalar_lea.vmem [#allocation7], %s231
        // Predicated region
        $region37: #{tpu_custom_call.1} parent=27 // pred_check
          %p233 = pneg %p92
        $region38: #{tpu_custom_call.1} parent=27 // pred_check_branch
          %235 = sbr.rel (%p233) target = $region40
        $region39: #{tpu_custom_call.1} parent=27 // pred_region
          %s236 = smul.u32 2, %s22
          %238 = vsyncadd %s229, 0
          %s239 = smul.addr %s236, 2
          %s240 = smul.addr %s239, 8
          %s241 = scalar_lea.hbm %s2, %s240
          %s242 = sshll.u32 %s232, 4
          %s243 = int_to_ptr.vmem [resolvable:$true] %s242
          %s244 = sshll.u32 %s241, 4
          %s245 = int_to_ptr.hbm [resolvable:$true] %s244
          %250 = dma.vmem_to_hbm [thread:$0]  %s243, 512, %s245, %s229, 128, 128, 8
        $region40: #{tpu_custom_call.1} parent=27 // pred_fallthru
          _
      $region28: #{tpu_custom_call.1} parent=5 // pred_fallthru
        _
      %p251 = scmp.le.s32.totalorder 2, %s17
      // Predicated region
      $region41: #{tpu_custom_call.1} parent=5 // pred_check
        %p252 = pneg %p251
      $region42: #{tpu_custom_call.1} parent=5 // pred_check_branch
        %254 = sbr.rel (%p252) target = $region44
      $region43: #{tpu_custom_call.1} parent=5 // pred_region
        %s255 = ssub.s32 %s17, 2
        // Predicated region
        $region45: #{tpu_custom_call.1} parent=43 // pred_check
          %p256 = pneg %p98
        $region46: #{tpu_custom_call.1} parent=43 // pred_check_branch
          %258 = sbr.rel (%p256) target = $region48
        $region47: #{tpu_custom_call.1} parent=43 // pred_region
          %s259 = sand.u32 %s83, 1
          %s260 = scalar_lea.sflag [#allocation4], %s259
          %s261 = sand.u32 %s83, 1
          %s262 = smul.addr %s261, 32
          %s263 = scalar_lea.vmem [#allocation7], %s262
          %265 = dma.done %s260, 512
        $region48: #{tpu_custom_call.1} parent=43 // pred_fallthru
          _
      $region44: #{tpu_custom_call.1} parent=5 // pred_fallthru
        _
    $region6: #{tpu_custom_call.1} parent=1 // loop_footer
      %s21 = sadd.s32 1, %s17
    $region7: #{tpu_custom_call.1} parent=1 // loop_footer_branch
      %16 = sbr.rel target = $region3
    $region8: #{tpu_custom_call.1} parent=1 // loop_exit
      _
    %266 = vsyncpa [#allocation3], 1
    %s267 = scalar_lea.sflag [#allocation3], 1
    %268 = vsyncpa %s267, 1
    %269 = vsyncpa [#allocation6], 1
    %s270 = scalar_lea.sflag [#allocation6], 1
    %271 = vsyncpa %s270, 1
    %272 = vsyncpa [#allocation4], 1
    %s273 = scalar_lea.sflag [#allocation4], 1
    %274 = vsyncpa %s273, 1

</llo_original>
